<compile_context>
chip_gen: v6e
topology: v6e:2x2x1
jax: 0.10.0
libtpu: 0.0.40
codegen_flags: <defaults>
</compile_context>

<pallas_src>
import functools

import jax
import jax.numpy as jnp
from jax.experimental import pallas as pl
from jax.experimental.pallas import tpu as pltpu


def autoencoder_kernel(x_ref, w1_ref, b1_ref, w2_ref, b2_ref, out_ref, *,
                       compute_dtype):
    # x arrives straight from HBM (f32); cast to the MXU compute dtype in-kernel
    # (VPU cast, hidden under DMA on this memory-bound kernel).
    x = x_ref[...].astype(compute_dtype)
    # Encoder: z = x @ W1^T + b1   (tb, in) @ (in, hid) -> (tb, hid), f32 accumulate.
    z = jnp.dot(x, w1_ref[...], preferred_element_type=jnp.float32)
    z = z + b1_ref[...]                       # (1, hid) broadcasts over batch rows
    # Decoder: r = z @ W2^T + b2. Intentional numerics choice: z is rounded to the
    # compute dtype before the second matmul; accumulation stays f32.
    r = jnp.dot(z.astype(compute_dtype), w2_ref[...],
                preferred_element_type=jnp.float32)
    r = r + b2_ref[...]                       # (1, in) broadcasts over batch rows
    out_ref[...] = r.astype(out_ref.dtype)


def _round_up(x, m):
    return -(-x // m) * m


def _choose_tile_b(B):
    """Batch tile: big enough to amortize the ~0.35us/step overhead, small enough to
    keep >= 4 grid steps (>= 2 per TensorCore on v7x) and stay well inside scoped
    VMEM on every generation."""
    if B >= 4096:
        return 1024
    if B >= 2048:
        return 512
    if B >= 64:
        # Aim for 4 grid steps; round rows to 16 (sublane-friendly for bf16 too).
        return max(16, _round_up(B, 4 * 16) // 4)
    return _round_up(B, 8)                    # tiny batch: single small tile


def autoencoder_forward(x, w1, b1, w2, b2, *, tile_b=None,
                        compute_dtype=jnp.bfloat16, out_dtype=None):
    """x: (B, input_size) f32; w1: (hidden, input) [PyTorch layout]; b1: (hidden,);
    w2: (input, hidden); b2: (input,). Returns (B, input_size) in out_dtype
    (defaults to x.dtype)."""
    B, input_size = x.shape
    hidden_size = w1.shape[0]
    if out_dtype is None:
        out_dtype = x.dtype

    if tile_b is None:
        tile_b = _choose_tile_b(B)
    tile_b = min(tile_b, _round_up(B, 8))

    # Only batch padding (no feature padding, no feature slice afterwards).
    B_p = _round_up(B, tile_b)
    if B_p != B:
        x = jnp.pad(x, ((0, B_p - B), (0, 0)))

    # Weights presented as (in, out), biases as (1, out) row vectors. These are tiny
    # (<0.25 MiB) trace-time transforms and stay VMEM-resident across the grid.
    w1_c = jnp.transpose(w1).astype(compute_dtype)    # (input, hidden)
    w2_c = jnp.transpose(w2).astype(compute_dtype)    # (hidden, input)
    b1_r = b1.reshape(1, hidden_size).astype(jnp.float32)
    b2_r = b2.reshape(1, input_size).astype(jnp.float32)

    grid = (B_p // tile_b,)

    # Advisory cost hint so XLA can schedule/overlap the custom call.
    flops = 2 * 2 * B_p * input_size * hidden_size
    bytes_accessed = (B_p * input_size * x.dtype.itemsize          # x in
                      + B_p * input_size * jnp.dtype(out_dtype).itemsize  # out
                      + w1_c.size * w1_c.dtype.itemsize
                      + w2_c.size * w2_c.dtype.itemsize
                      + b1_r.size * 4 + b2_r.size * 4)
    cost = pl.CostEstimate(flops=flops, transcendentals=0,
                           bytes_accessed=bytes_accessed)

    kernel = functools.partial(autoencoder_kernel, compute_dtype=compute_dtype)

    out = pl.pallas_call(
        kernel,
        out_shape=jax.ShapeDtypeStruct((B_p, input_size), out_dtype),
        grid_spec=pltpu.PrefetchScalarGridSpec(
            num_scalar_prefetch=0,
            grid=grid,
            in_specs=[
                pl.BlockSpec((tile_b, input_size), lambda i: (i, 0)),       # x tile
                pl.BlockSpec((input_size, hidden_size), lambda i: (0, 0)),  # W1^T
                pl.BlockSpec((1, hidden_size), lambda i: (0, 0)),           # b1
                pl.BlockSpec((hidden_size, input_size), lambda i: (0, 0)),  # W2^T
                pl.BlockSpec((1, input_size), lambda i: (0, 0)),            # b2
            ],
            out_specs=pl.BlockSpec((tile_b, input_size), lambda i: (i, 0)),
        ),
        compiler_params=pltpu.CompilerParams(
            dimension_semantics=("parallel",),
            vmem_limit_bytes=32 * 1024 * 1024,
        ),
        cost_estimate=cost,
    )(x, w1_c, b1_r, w2_c, b2_r)

    # Strip batch padding only when present (no feature-dim slice anymore).
    if B_p != B:
        out = out[:B]
    return out


def init_params(key, input_size=784, hidden_size=64):
    """Deterministic init mimicking nn.Linear's uniform(-1/sqrt(fan_in), 1/sqrt(fan_in))."""
    k1, k2, k3, k4 = jax.random.split(key, 4)
    bound_enc = 1.0 / jnp.sqrt(jnp.float32(input_size))
    bound_dec = 1.0 / jnp.sqrt(jnp.float32(hidden_size))
    w1 = jax.random.uniform(k1, (hidden_size, input_size), jnp.float32,
                            -bound_enc, bound_enc)
    b1 = jax.random.uniform(k2, (hidden_size,), jnp.float32, -bound_enc, bound_enc)
    w2 = jax.random.uniform(k3, (input_size, hidden_size), jnp.float32,
                            -bound_dec, bound_dec)
    b2 = jax.random.uniform(k4, (input_size,), jnp.float32, -bound_dec, bound_dec)
    return w1, b1, w2, b2


if __name__ == "__main__":
    # Small smoke-test shapes consistent with the module (batch chosen so the grid
    # has 4 steps and the batch needs no padding/slice).
    input_size, hidden_size, batch = 784, 64, 64
    key = jax.random.PRNGKey(0)
    kx, kp = jax.random.split(key)

    x = jax.random.normal(kx, (batch, input_size), jnp.float32)
    w1, b1, w2, b2 = init_params(kp, input_size, hidden_size)

    out = autoencoder_forward(x, w1, b1, w2, b2)
    out = jax.block_until_ready(out)
    assert out.shape == (batch, input_size)
    assert out.dtype == jnp.float32

    # Reference check 1: same math as the kernel (bf16-rounded operands, f32 accum).
    xb = x.astype(jnp.bfloat16).astype(jnp.float32)
    w1b = w1.astype(jnp.bfloat16).astype(jnp.float32)
    w2b = w2.astype(jnp.bfloat16).astype(jnp.float32)
    z_bf = xb @ w1b.T + b1
    r_bf = z_bf.astype(jnp.bfloat16).astype(jnp.float32) @ w2b.T + b2
    assert jnp.allclose(out, r_bf, atol=1e-2, rtol=1e-2)

    # Reference check 2: faithful f32 PyTorch forward (no nonlinearity in the spec),
    # looser tolerance to absorb the intentional bf16 compute error.
    z_ref = x @ w1.T + b1
    r_ref = z_ref @ w2.T + b2
    assert jnp.allclose(out, r_ref, atol=5e-2, rtol=5e-2)

    print("KERNEL_OK")
</pallas_src>

<mosaic_0001>
module attributes {stable_mosaic.version = 11 : i64} {
  func.func @autoencoder_kernel(%arg0: i32, %arg1: memref<16x784xf32, #tpu.memory_space<vmem>>, %arg2: memref<784x64xbf16, #tpu.memory_space<vmem>>, %arg3: memref<1x64xf32, #tpu.memory_space<vmem>>, %arg4: memref<64x784xbf16, #tpu.memory_space<vmem>>, %arg5: memref<1x784xf32, #tpu.memory_space<vmem>>, %arg6: memref<16x784xf32, #tpu.memory_space<vmem>>) attributes {dimension_semantics = [#tpu.dimension_semantics<parallel>], iteration_bounds = array<i64: 4>, scalar_prefetch = 0 : i64, scratch_operands = 0 : i64, tpu.core_type = #tpu.core_type<tc>, window_params = [{transform_indices = @transform_0, window_bounds = array<i64: 16, 784>}, {pipeline_mode = #tpu.pipeline_mode<synchronous>, transform_indices = @transform_1, window_bounds = array<i64: 784, 64>}, {pipeline_mode = #tpu.pipeline_mode<synchronous>, transform_indices = @transform_2, window_bounds = array<i64: 1, 64>}, {pipeline_mode = #tpu.pipeline_mode<synchronous>, transform_indices = @transform_3, window_bounds = array<i64: 64, 784>}, {pipeline_mode = #tpu.pipeline_mode<synchronous>, transform_indices = @transform_4, window_bounds = array<i64: 1, 784>}, {transform_indices = @transform_5, window_bounds = array<i64: 16, 784>}]} {
    %c0 = arith.constant 0 : index
    %c0_0 = arith.constant 0 : index
    %0 = vector.load %arg1[%c0, %c0_0] : memref<16x784xf32, #tpu.memory_space<vmem>>, vector<16x784xf32>
    %1 = arith.truncf %0 : vector<16x784xf32> to vector<16x784xbf16>
    %c0_1 = arith.constant 0 : index
    %c0_2 = arith.constant 0 : index
    %2 = vector.load %arg2[%c0_1, %c0_2] : memref<784x64xbf16, #tpu.memory_space<vmem>>, vector<784x64xbf16>
    %cst = arith.constant dense<0.000000e+00> : vector<16x64xf32>
    %3 = tpu.matmul %1, %2, %cst {dimension_numbers = #tpu.dot_dimension_numbers<[1], [0], [0], [1], [0, 0, 1, 1], [], []>} : vector<16x784xbf16>, vector<784x64xbf16>, vector<16x64xf32> -> vector<16x64xf32>
    %c0_3 = arith.constant 0 : index
    %c0_4 = arith.constant 0 : index
    %4 = vector.load %arg3[%c0_3, %c0_4] : memref<1x64xf32, #tpu.memory_space<vmem>>, vector<1x64xf32>
    %5 = vector.broadcast %4 : vector<1x64xf32> to vector<16x64xf32>
    %6 = arith.addf %3, %5 : vector<16x64xf32>
    %7 = arith.truncf %6 : vector<16x64xf32> to vector<16x64xbf16>
    %c0_5 = arith.constant 0 : index
    %c0_6 = arith.constant 0 : index
    %8 = vector.load %arg4[%c0_5, %c0_6] : memref<64x784xbf16, #tpu.memory_space<vmem>>, vector<64x784xbf16>
    %cst_7 = arith.constant dense<0.000000e+00> : vector<16x784xf32>
    %9 = tpu.matmul %7, %8, %cst_7 {dimension_numbers = #tpu.dot_dimension_numbers<[1], [0], [0], [1], [0, 0, 1, 1], [], []>} : vector<16x64xbf16>, vector<64x784xbf16>, vector<16x784xf32> -> vector<16x784xf32>
    %c0_8 = arith.constant 0 : index
    %c0_9 = arith.constant 0 : index
    %10 = vector.load %arg5[%c0_8, %c0_9] : memref<1x784xf32, #tpu.memory_space<vmem>>, vector<1x784xf32>
    %11 = vector.broadcast %10 : vector<1x784xf32> to vector<16x784xf32>
    %12 = arith.addf %9, %11 : vector<16x784xf32>
    %c0_10 = arith.constant 0 : index
    %c0_11 = arith.constant 0 : index
    %13 = vector.load %arg6[%c0_10, %c0_11] : memref<16x784xf32, #tpu.memory_space<vmem>>, vector<16x784xf32>
    tpu.vector_store %arg6[%c0_10, %c0_11], %12 {strides = array<i32>} : memref<16x784xf32, #tpu.memory_space<vmem>>, vector<16x784xf32>,
    return
  }
  func.func @transform_0(%arg0: i32) -> (i32, i32) {
    %c0_i32 = arith.constant 0 : i32
    %c0_i32_0 = arith.constant 0 : i32
    return %arg0, %c0_i32 : i32, i32
  }
  func.func @transform_1(%arg0: i32) -> (i32, i32) {
    %c0_i32 = arith.constant 0 : i32
    %c0_i32_0 = arith.constant 0 : i32
    %c0_i32_1 = arith.constant 0 : i32
    return %c0_i32, %c0_i32_0 : i32, i32
  }
  func.func @transform_2(%arg0: i32) -> (i32, i32) {
    %c0_i32 = arith.constant 0 : i32
    %c0_i32_0 = arith.constant 0 : i32
    %c0_i32_1 = arith.constant 0 : i32
    return %c0_i32, %c0_i32_0 : i32, i32
  }
  func.func @transform_3(%arg0: i32) -> (i32, i32) {
    %c0_i32 = arith.constant 0 : i32
    %c0_i32_0 = arith.constant 0 : i32
    %c0_i32_1 = arith.constant 0 : i32
    return %c0_i32, %c0_i32_0 : i32, i32
  }
  func.func @transform_4(%arg0: i32) -> (i32, i32) {
    %c0_i32 = arith.constant 0 : i32
    %c0_i32_0 = arith.constant 0 : i32
    %c0_i32_1 = arith.constant 0 : i32
    return %c0_i32, %c0_i32_0 : i32, i32
  }
  func.func @transform_5(%arg0: i32) -> (i32, i32) {
    %c0_i32 = arith.constant 0 : i32
    %c0_i32_0 = arith.constant 0 : i32
    return %arg0, %c0_i32 : i32, i32
  }
}

</mosaic_0001>

<llo_original>
// kernel: tpu_custom_call.1
$region0: #{tpu_custom_call.1}
  #allocation0 [shape = 'u32[]', space=smem, size = 0x4, offset = 0x4, fixed_abs, tag = 'smem constant byte address 0x4 - core index']
  #allocation1 [shape = 'u32[144,128]{1,0:T(1,128)}', space=vmem, size = 0x12000, scoped, tag = 'internal scratch']
  %s0 = inlined_call_operand.vmem [shape: f32[64,784], index: 0, kind: input, shape index: {}]
  %s1 = inlined_call_operand.vmem [shape: bf16[784,64], index: 1, kind: input, shape index: {}]
  %s2 = inlined_call_operand.vmem [shape: f32[1,64], index: 2, kind: input, shape index: {}]
  %s3 = inlined_call_operand.hbm [shape: bf16[64,784], index: 3, kind: input, shape index: {}]
  %s4 = inlined_call_operand.vmem [shape: f32[1,784], index: 4, kind: input, shape index: {}]
  %s5 = inlined_call_operand.hbm [shape: f32[64,784], index: 5, kind: output, shape index: {}]
  %s6 = sld [smem:[#allocation0]]
  $region57: #{tpu_custom_call.1} parent=0
    _
  %s8 = ssub.s32 1, %s6
  %s9 = scalar_select 0, %s8, %s6
  $region1: #{tpu_custom_call.1} parent=0
    #allocation2 [shape = 'u8[114688]{0}', space=vmem, size = 0x1c000, scoped, tag = 'input window, operand 3, single buffered']
    #allocation3 [shape = 's32[2]{0}', space=sflag, size = 0x8, scoped, tag = 'scoped memory for tpu_custom_call.1']
    #allocation4 [shape = 's32[2]{0}', space=sflag, size = 0x8, scoped, tag = 'scoped memory for tpu_custom_call.1']
    #allocation5 [shape = 'u8[114688]{0}', space=vmem, size = 0x1c000, scoped, tag = 'output window, operand 0']
    %10 = vsyncpa [#allocation3], 0
    %11 = vsyncpa [#allocation4], 0
    %s12 = scalar_lea.sflag [#allocation4], 1
    %13 = vsyncpa %s12, 0
    loop: start=0, step=1, limit=6
    $region2: #{tpu_custom_call.1} parent=1 // loop_pre_header
      _
    $region3: #{tpu_custom_call.1} parent=1 // loop_header
      %s15 = sphi 0, %s19
      %p16 = scmp.ge.s32.totalorder %s15, 6
      %s25 = sphi 0, %s27
      %s28 = sphi 0, %s25
      %s29 = sphi 0, %s28
      %s45 = sphi 0, %s29
      %s49 = sphi 0, %s49
      %s51 = sphi 0, %s49
      %s52 = sphi 0, %s51
      %s66 = sphi 0, %s52
      %s70 = sphi 0, %s70
      %s72 = sphi 0, %s70
      %s73 = sphi 0, %s72
      %s87 = sphi 0, %s73
      %s91 = sphi 0, %s91
      %s93 = sphi 0, %s91
      %s94 = sphi 0, %s93
      %s108 = sphi 0, %s94
      %s112 = sphi 0, %s112
      %s114 = sphi 0, %s112
      %s115 = sphi 0, %s114
      %s129 = sphi 0, %s115
      %s135 = sphi 0, %s137
      %s138 = sphi 0, %s135
      %s139 = sphi 0, %s138
      %s155 = sphi 0, %s139
    $region4: #{tpu_custom_call.1} parent=1 // loop_header_branch
      %18 = sbr.rel (%p16) target = $region8
    $region5: #{tpu_custom_call.1} parent=1 // loop_body
      %s20 = ssub.s32 %s15, 1
      %s21 = ssub.s32 %s15, 2
      %s22 = sadd.s32 %s15, 1
      %s23 = ssub.s32 %s15, %s22
      %p24 = scmp.eq.s32.totalorder %s23, 0
      %s26 = sadd.s32 %s25, 1
      %s27 = scalar_select %p24, %s25, %s26
      %p30 = pneg %p24
      %p31 = scmp.eq.s32.totalorder %s15, 3
      %p32 = por %p30, %p31
      %p33 = scmp.ne.s32.totalorder %s25, %s28
      %p34 = scmp.eq.s32.totalorder %s15, 0
      %p35 = por %p33, %p34
      %p36 = scmp.ne.s32.totalorder %s25, %s28
      %p37 = scmp.eq.s32.totalorder %s20, 3
      %p38 = por %p36, %p37
      %p39 = scmp.ne.s32.totalorder %s28, %s29
      %p40 = scmp.eq.s32.totalorder %s20, 0
      %p41 = por %p39, %p40
      %p42 = scmp.ne.s32.totalorder %s28, %s29
      %p43 = scmp.eq.s32.totalorder %s21, 3
      %p44 = por %p42, %p43
      %p46 = scmp.ne.s32.totalorder %s29, %s45
      %p47 = scmp.eq.s32.totalorder %s21, 0
      %p48 = por %p46, %p47
      %s50 = sadd.s32 %s49, 1
      %p53 = scmp.eq.s32.totalorder %s15, 3
      %p54 = scmp.ne.s32.totalorder %s49, %s51
      %p55 = scmp.eq.s32.totalorder %s15, 0
      %p56 = por %p54, %p55
      %p57 = scmp.ne.s32.totalorder %s49, %s51
      %p58 = scmp.eq.s32.totalorder %s20, 3
      %p59 = por %p57, %p58
      %p60 = scmp.ne.s32.totalorder %s51, %s52
      %p61 = scmp.eq.s32.totalorder %s20, 0
      %p62 = por %p60, %p61
      %p63 = scmp.ne.s32.totalorder %s51, %s52
      %p64 = scmp.eq.s32.totalorder %s21, 3
      %p65 = por %p63, %p64
      %p67 = scmp.ne.s32.totalorder %s52, %s66
      %p68 = scmp.eq.s32.totalorder %s21, 0
      %p69 = por %p67, %p68
      %s71 = sadd.s32 %s70, 1
      %p74 = scmp.eq.s32.totalorder %s15, 3
      %p75 = scmp.ne.s32.totalorder %s70, %s72
      %p76 = scmp.eq.s32.totalorder %s15, 0
      %p77 = por %p75, %p76
      %p78 = scmp.ne.s32.totalorder %s70, %s72
      %p79 = scmp.eq.s32.totalorder %s20, 3
      %p80 = por %p78, %p79
      %p81 = scmp.ne.s32.totalorder %s72, %s73
      %p82 = scmp.eq.s32.totalorder %s20, 0
      %p83 = por %p81, %p82
      %p84 = scmp.ne.s32.totalorder %s72, %s73
      %p85 = scmp.eq.s32.totalorder %s21, 3
      %p86 = por %p84, %p85
      %p88 = scmp.ne.s32.totalorder %s73, %s87
      %p89 = scmp.eq.s32.totalorder %s21, 0
      %p90 = por %p88, %p89
      %s92 = sadd.s32 %s91, 1
      %p95 = scmp.eq.s32.totalorder %s15, 3
      %p96 = scmp.ne.s32.totalorder %s91, %s93
      %p97 = scmp.eq.s32.totalorder %s15, 0
      %p98 = por %p96, %p97
      %p99 = scmp.ne.s32.totalorder %s91, %s93
      %p100 = scmp.eq.s32.totalorder %s20, 3
      %p101 = por %p99, %p100
      %p102 = scmp.ne.s32.totalorder %s93, %s94
      %p103 = scmp.eq.s32.totalorder %s20, 0
      %p104 = por %p102, %p103
      %p105 = scmp.ne.s32.totalorder %s93, %s94
      %p106 = scmp.eq.s32.totalorder %s21, 3
      %p107 = por %p105, %p106
      %p109 = scmp.ne.s32.totalorder %s94, %s108
      %p110 = scmp.eq.s32.totalorder %s21, 0
      %p111 = por %p109, %p110
      %s113 = sadd.s32 %s112, 1
      %p116 = scmp.eq.s32.totalorder %s15, 3
      %p117 = scmp.ne.s32.totalorder %s112, %s114
      %p118 = scmp.eq.s32.totalorder %s15, 0
      %p119 = por %p117, %p118
      %p120 = scmp.ne.s32.totalorder %s112, %s114
      %p121 = scmp.eq.s32.totalorder %s20, 3
      %p122 = por %p120, %p121
      %p123 = scmp.ne.s32.totalorder %s114, %s115
      %p124 = scmp.eq.s32.totalorder %s20, 0
      %p125 = por %p123, %p124
      %p126 = scmp.ne.s32.totalorder %s114, %s115
      %p127 = scmp.eq.s32.totalorder %s21, 3
      %p128 = por %p126, %p127
      %p130 = scmp.ne.s32.totalorder %s115, %s129
      %p131 = scmp.eq.s32.totalorder %s21, 0
      %p132 = por %p130, %p131
      %s133 = ssub.s32 %s15, %s22
      %p134 = scmp.eq.s32.totalorder %s133, 0
      %s136 = sadd.s32 %s135, 1
      %s137 = scalar_select %p134, %s135, %s136
      %p140 = pneg %p134
      %p141 = scmp.eq.s32.totalorder %s15, 3
      %p142 = por %p140, %p141
      %p143 = scmp.ne.s32.totalorder %s135, %s138
      %p144 = scmp.eq.s32.totalorder %s15, 0
      %p145 = por %p143, %p144
      %p146 = scmp.ne.s32.totalorder %s135, %s138
      %p147 = scmp.eq.s32.totalorder %s20, 3
      %p148 = por %p146, %p147
      %p149 = scmp.ne.s32.totalorder %s138, %s139
      %p150 = scmp.eq.s32.totalorder %s20, 0
      %p151 = por %p149, %p150
      %p152 = scmp.ne.s32.totalorder %s138, %s139
      %p153 = scmp.eq.s32.totalorder %s21, 3
      %p154 = por %p152, %p153
      %p156 = scmp.ne.s32.totalorder %s139, %s155
      %p157 = scmp.eq.s32.totalorder %s21, 0
      %p158 = por %p156, %p157
      %p159 = scmp.le.s32.totalorder 1, %s15
      %p160 = scmp.lt.s32.totalorder %s15, 5
      %p161 = pnand %p159, %p160
      %p162 = pneg %p161
      // Predicated region
      $region9: #{tpu_custom_call.1} parent=5 // pred_check
        _
      $region10: #{tpu_custom_call.1} parent=5 // pred_check_branch
        %164 = sbr.rel (%p161) target = $region12
      $region11: #{tpu_custom_call.1} parent=5 // pred_region
        %s165 = ssub.s32 %s15, 1
        // Predicated region
        $region13: #{tpu_custom_call.1} parent=11 // pred_check
          %p166 = pneg %p62
        $region14: #{tpu_custom_call.1} parent=11 // pred_check_branch
          %168 = sbr.rel (%p166) target = $region16
        $region15: #{tpu_custom_call.1} parent=11 // pred_region
          _
        $region16: #{tpu_custom_call.1} parent=11 // pred_fallthru
          _
        // Predicated region
        $region17: #{tpu_custom_call.1} parent=11 // pred_check
          %p169 = pneg %p83
        $region18: #{tpu_custom_call.1} parent=11 // pred_check_branch
          %171 = sbr.rel (%p169) target = $region20
        $region19: #{tpu_custom_call.1} parent=11 // pred_region
          _
        $region20: #{tpu_custom_call.1} parent=11 // pred_fallthru
          _
        // Predicated region
        $region21: #{tpu_custom_call.1} parent=11 // pred_check
          %p172 = pneg %p104
        $region22: #{tpu_custom_call.1} parent=11 // pred_check_branch
          %174 = sbr.rel (%p172) target = $region24
        $region23: #{tpu_custom_call.1} parent=11 // pred_region
          %s176 = ssub.s32 3584, 3584
          %177 = vsyncadd [#allocation3], %s176
          %s178 = sshll.u32 [#allocation2], 4
          %s179 = int_to_ptr.vmem [resolvable:$true] %s178
          %184 = dma.hbm_to_vmem [thread:$0]  %s3, 3584, %s179, [#allocation3], 448, 448, 28
        $region24: #{tpu_custom_call.1} parent=11 // pred_fallthru
          _
        // Predicated region
        $region25: #{tpu_custom_call.1} parent=11 // pred_check
          %p185 = pneg %p125
        $region26: #{tpu_custom_call.1} parent=11 // pred_check_branch
          %187 = sbr.rel (%p185) target = $region28
        $region27: #{tpu_custom_call.1} parent=11 // pred_region
          _
        $region28: #{tpu_custom_call.1} parent=11 // pred_fallthru
          _
      $region12: #{tpu_custom_call.1} parent=5 // pred_fallthru
        _
      %p188 = scmp.lt.s32.totalorder %s15, 4
      // Predicated region
      $region29: #{tpu_custom_call.1} parent=5 // pred_check
        %p189 = pneg %p188
      $region30: #{tpu_custom_call.1} parent=5 // pred_check_branch
        %191 = sbr.rel (%p189) target = $region32
      $region31: #{tpu_custom_call.1} parent=5 // pred_region
        // Predicated region
        $region33: #{tpu_custom_call.1} parent=31 // pred_check
          %p192 = pneg %p35
        $region34: #{tpu_custom_call.1} parent=31 // pred_check_branch
          %194 = sbr.rel (%p192) target = $region36
        $region35: #{tpu_custom_call.1} parent=31 // pred_region
          %s195 = smul.u32 2, %s15
          %p196 = scmp.lt.s32.totalorder %s195, 7
          %s197 = scalar_select %p196, %s195, 7
          %s198 = smul.addr %s197, 7
          %s199 = smul.addr %s198, 8
          %s200 = scalar_lea.vmem %s0, %s199
          %s201 = smul.u32 2, %s15
        $region36: #{tpu_custom_call.1} parent=31 // pred_fallthru
          _
      $region32: #{tpu_custom_call.1} parent=5 // pred_fallthru
        _
      %p202 = scmp.le.s32.totalorder 1, %s15
      %p203 = scmp.lt.s32.totalorder %s15, 5
      %p204 = pnand %p202, %p203
      %p205 = pneg %p204
      // Predicated region
      $region37: #{tpu_custom_call.1} parent=5 // pred_check
        _
      $region38: #{tpu_custom_call.1} parent=5 // pred_check_branch
        %207 = sbr.rel (%p204) target = $region40
      $region39: #{tpu_custom_call.1} parent=5 // pred_region
        %s208 = ssub.s32 %s15, 1
        // Predicated region
        $region41: #{tpu_custom_call.1} parent=39 // pred_check
          %p209 = pneg %p104
        $region42: #{tpu_custom_call.1} parent=39 // pred_check_branch
          %211 = sbr.rel (%p209) target = $region44
        $region43: #{tpu_custom_call.1} parent=39 // pred_region
          %212 = dma.done [#allocation3], 3584
        $region44: #{tpu_custom_call.1} parent=39 // pred_fallthru
          _
        %s213 = smul.u32 2, %s20
        %p214 = scmp.lt.s32.totalorder %s213, 7
        %s215 = scalar_select %p214, %s213, 7
        %s216 = smul.addr %s215, 7
        %s217 = smul.addr %s216, 8
        %s218 = scalar_lea.vmem %s0, %s217
        %p219 = pneg %p41
        %p220 = pneg %p38
        %p221 = pneg %p62
        %p222 = pneg %p59
        %p223 = pneg %p83
        %p224 = pneg %p80
        %p225 = pneg %p104
        %p226 = pneg %p101
        %p227 = pneg %p125
        %p228 = pneg %p122
        %p229 = pneg %p151
        %p230 = pneg %p148
        %s231 = sand.u32 %s138, 1
        %s232 = scalar_lea.sflag [#allocation4], %s231
        %s233 = sand.u32 %s138, 1
        %s234 = smul.addr %s233, 112
        %s235 = scalar_lea.vmem [#allocation5], %s234
        %s236 = smul.u32 2, %s20
        %p237 = scmp.lt.s32.totalorder %s236, 7
        %s238 = scalar_select %p237, %s236, 7
        %s239 = smul.addr %s238, 7
        %s240 = smul.addr %s239, 8
        %s241 = scalar_lea.vmem %s0, %s240
        %s242 = smul.u32 2, %s20
        %s243 = smul.u32 2, %s20
        %v245 = vld [vmem:[%s241] sm:$0xff]
        %v246 = vld [vmem:[%s241 + $0x8] sm:$0xff]
        %v247 = vld [vmem:[%s241 + $0x10] sm:$0xff]
        %v248 = vld [vmem:[%s241 + $0x18] sm:$0xff]
        %v249 = vld [vmem:[%s241 + $0x20] sm:$0xff]
        %v250 = vld [vmem:[%s241 + $0x28] sm:$0xff]
        %v251 = vld [vmem:[%s241 + $0x30] sm:$0xff]
        %v252 = vld [vmem:[%s241 + $0x38] sm:$0xff]
        %v253 = vld [vmem:[%s241 + $0x40] sm:$0xff]
        %v254 = vld [vmem:[%s241 + $0x48] sm:$0xff]
        %v255 = vld [vmem:[%s241 + $0x50] sm:$0xff]
        %v256 = vld [vmem:[%s241 + $0x58] sm:$0xff]
        %v257 = vld [vmem:[%s241 + $0x60] sm:$0xff]
        %v258 = vld [vmem:[%s241 + $0x68] sm:$0xff]
        %v259 = vpack.c.bf16 %v252, %v245
        %v260 = vpack.c.bf16 %v253, %v246
        %v261 = vpack.c.bf16 %v254, %v247
        %v262 = vpack.c.bf16 %v255, %v248
        %v263 = vpack.c.bf16 %v256, %v249
        %v264 = vpack.c.bf16 %v257, %v250
        %v265 = vpack.c.bf16 %v258, %v251
        %v266 = vld [vmem:[%s1] sm:$0xf]
        %v267 = vld [vmem:[%s1 + $0x4] sm:$0xf]
        %v268 = vld [vmem:[%s1 + $0x8] sm:$0xf]
        %v269 = vld [vmem:[%s1 + $0xc] sm:$0xf]
        %v270 = vld [vmem:[%s1 + $0x10] sm:$0xf]
        %v271 = vld [vmem:[%s1 + $0x14] sm:$0xf]
        %v272 = vld [vmem:[%s1 + $0x18] sm:$0xf]
        %v273 = vld [vmem:[%s1 + $0x1c] sm:$0xf]
        %v274 = vld [vmem:[%s1 + $0x20] sm:$0xf]
        %v275 = vld [vmem:[%s1 + $0x24] sm:$0xf]
        %v276 = vld [vmem:[%s1 + $0x28] sm:$0xf]
        %v277 = vld [vmem:[%s1 + $0x2c] sm:$0xf]
        %v278 = vld [vmem:[%s1 + $0x30] sm:$0xf]
        %v279 = vld [vmem:[%s1 + $0x34] sm:$0xf]
        %v280 = vld [vmem:[%s1 + $0x38] sm:$0xf]
        %v281 = vld [vmem:[%s1 + $0x3c] sm:$0xf]
        %v282 = vld [vmem:[%s1 + $0x40] sm:$0xf]
        %v283 = vld [vmem:[%s1 + $0x44] sm:$0xf]
        %v284 = vld [vmem:[%s1 + $0x48] sm:$0xf]
        %v285 = vld [vmem:[%s1 + $0x4c] sm:$0xf]
        %v286 = vld [vmem:[%s1 + $0x50] sm:$0xf]
        %v287 = vld [vmem:[%s1 + $0x54] sm:$0xf]
        %v288 = vld [vmem:[%s1 + $0x58] sm:$0xf]
        %v289 = vld [vmem:[%s1 + $0x5c] sm:$0xf]
        %v290 = vld [vmem:[%s1 + $0x60] sm:$0xf]
        %v291 = vld [vmem:[%s1 + $0x64] sm:$0xf]
        %v292 = vld [vmem:[%s1 + $0x68] sm:$0xf]
        %v293 = vld [vmem:[%s1 + $0x6c] sm:$0xf]
        %v294 = vld [vmem:[%s1 + $0x70] sm:$0xf]
        %v295 = vld [vmem:[%s1 + $0x74] sm:$0xf]
        %v296 = vld [vmem:[%s1 + $0x78] sm:$0xf]
        %v297 = vld [vmem:[%s1 + $0x7c] sm:$0xf]
        %v298 = vld [vmem:[%s1 + $0x80] sm:$0xf]
        %v299 = vld [vmem:[%s1 + $0x84] sm:$0xf]
        %v300 = vld [vmem:[%s1 + $0x88] sm:$0xf]
        %v301 = vld [vmem:[%s1 + $0x8c] sm:$0xf]
        %v302 = vld [vmem:[%s1 + $0x90] sm:$0xf]
        %v303 = vld [vmem:[%s1 + $0x94] sm:$0xf]
        %v304 = vld [vmem:[%s1 + $0x98] sm:$0xf]
        %v305 = vld [vmem:[%s1 + $0x9c] sm:$0xf]
        %v306 = vld [vmem:[%s1 + $0xa0] sm:$0xf]
        %v307 = vld [vmem:[%s1 + $0xa4] sm:$0xf]
        %v308 = vld [vmem:[%s1 + $0xa8] sm:$0xf]
        %v309 = vld [vmem:[%s1 + $0xac] sm:$0xf]
        %v310 = vld [vmem:[%s1 + $0xb0] sm:$0xf]
        %v311 = vld [vmem:[%s1 + $0xb4] sm:$0xf]
        %v312 = vld [vmem:[%s1 + $0xb8] sm:$0xf]
        %v313 = vld [vmem:[%s1 + $0xbc] sm:$0xf]
        %v314 = vld [vmem:[%s1 + $0xc0] sm:$0xf]
        %v315 = vld [vmem:[%s1 + $0xc4] sm:$0xf]
        %v316 = vld [vmem:[%s1 + $0xc8] sm:$0xf]
        %v317 = vld [vmem:[%s1 + $0xcc] sm:$0xf]
        %v318 = vld [vmem:[%s1 + $0xd0] sm:$0xf]
        %v319 = vld [vmem:[%s1 + $0xd4] sm:$0xf]
        %v320 = vld [vmem:[%s1 + $0xd8] sm:$0xf]
        %v321 = vld [vmem:[%s1 + $0xdc] sm:$0xf]
        %v322 = vld [vmem:[%s1 + $0xe0] sm:$0xf]
        %v323 = vld [vmem:[%s1 + $0xe4] sm:$0xf]
        %v324 = vld [vmem:[%s1 + $0xe8] sm:$0xf]
        %v325 = vld [vmem:[%s1 + $0xec] sm:$0xf]
        %v326 = vld [vmem:[%s1 + $0xf0] sm:$0xf]
        %v327 = vld [vmem:[%s1 + $0xf4] sm:$0xf]
        %v328 = vld [vmem:[%s1 + $0xf8] sm:$0xf]
        %v329 = vld [vmem:[%s1 + $0xfc] sm:$0xf]
        %v330 = vld [vmem:[%s1 + $0x100] sm:$0xf]
        %v331 = vld [vmem:[%s1 + $0x104] sm:$0xf]
        %v332 = vld [vmem:[%s1 + $0x108] sm:$0xf]
        %v333 = vld [vmem:[%s1 + $0x10c] sm:$0xf]
        %v334 = vld [vmem:[%s1 + $0x110] sm:$0xf]
        %v335 = vld [vmem:[%s1 + $0x114] sm:$0xf]
        %v336 = vld [vmem:[%s1 + $0x118] sm:$0xf]
        %v337 = vld [vmem:[%s1 + $0x11c] sm:$0xf]
        %v338 = vld [vmem:[%s1 + $0x120] sm:$0xf]
        %v339 = vld [vmem:[%s1 + $0x124] sm:$0xf]
        %v340 = vld [vmem:[%s1 + $0x128] sm:$0xf]
        %v341 = vld [vmem:[%s1 + $0x12c] sm:$0xf]
        %v342 = vld [vmem:[%s1 + $0x130] sm:$0xf]
        %v343 = vld [vmem:[%s1 + $0x134] sm:$0xf]
        %v344 = vld [vmem:[%s1 + $0x138] sm:$0xf]
        %v345 = vld [vmem:[%s1 + $0x13c] sm:$0xf]
        %v346 = vld [vmem:[%s1 + $0x140] sm:$0xf]
        %v347 = vld [vmem:[%s1 + $0x144] sm:$0xf]
        %v348 = vld [vmem:[%s1 + $0x148] sm:$0xf]
        %v349 = vld [vmem:[%s1 + $0x14c] sm:$0xf]
        %v350 = vld [vmem:[%s1 + $0x150] sm:$0xf]
        %v351 = vld [vmem:[%s1 + $0x154] sm:$0xf]
        %v352 = vld [vmem:[%s1 + $0x158] sm:$0xf]
        %v353 = vld [vmem:[%s1 + $0x15c] sm:$0xf]
        %v354 = vld [vmem:[%s1 + $0x160] sm:$0xf]
        %v355 = vld [vmem:[%s1 + $0x164] sm:$0xf]
        %v356 = vld [vmem:[%s1 + $0x168] sm:$0xf]
        %v357 = vld [vmem:[%s1 + $0x16c] sm:$0xf]
        %v358 = vld [vmem:[%s1 + $0x170] sm:$0xf]
        %v359 = vld [vmem:[%s1 + $0x174] sm:$0xf]
        %v360 = vld [vmem:[%s1 + $0x178] sm:$0xf]
        %v361 = vld [vmem:[%s1 + $0x17c] sm:$0xf]
        %v362 = vld [vmem:[%s1 + $0x180] sm:$0xf]
        %v363 = vld [vmem:[%s1 + $0x184] sm:$0xf]
        %v364 = vld [vmem:[%s2] sm:$0x1]
        %v366 = vlaneseq
        %v367 = vshrl.u32 %v366, 7
        %v368 = vsub.s32 0, %v367
        %v369 = vrot.slane %v364, %v368
        %v469 = vunpack.c.l.b16 %v266
        %v470 = vunpack.c.l.b16 %v267
        %v471 = vunpack.c.l.b16 %v268
        %v472 = vunpack.c.l.b16 %v269
        %v473 = vunpack.c.l.b16 %v270
        %v474 = vunpack.c.l.b16 %v271
        %v475 = vunpack.c.l.b16 %v272
        %v476 = vunpack.c.l.b16 %v273
        %v477 = vunpack.c.l.b16 %v274
        %v478 = vunpack.c.l.b16 %v275
        %v479 = vunpack.c.l.b16 %v276
        %v480 = vunpack.c.l.b16 %v277
        %v481 = vunpack.c.l.b16 %v278
        %v482 = vunpack.c.l.b16 %v279
        %v483 = vunpack.c.l.b16 %v280
        %v484 = vunpack.c.l.b16 %v281
        %v485 = vunpack.c.l.b16 %v282
        %v486 = vunpack.c.l.b16 %v283
        %v487 = vunpack.c.l.b16 %v284
        %v488 = vunpack.c.l.b16 %v285
        %v489 = vunpack.c.l.b16 %v286
        %v490 = vunpack.c.l.b16 %v287
        %v491 = vunpack.c.l.b16 %v288
        %v492 = vunpack.c.l.b16 %v289
        %v493 = vunpack.c.l.b16 %v290
        %v494 = vunpack.c.l.b16 %v291
        %v495 = vunpack.c.l.b16 %v292
        %v496 = vunpack.c.l.b16 %v293
        %v497 = vunpack.c.l.b16 %v294
        %v498 = vunpack.c.l.b16 %v295
        %v499 = vunpack.c.l.b16 %v296
        %v500 = vunpack.c.l.b16 %v297
        %v501 = vunpack.c.l.b16 %v298
        %v502 = vunpack.c.l.b16 %v299
        %v503 = vunpack.c.l.b16 %v300
        %v504 = vunpack.c.l.b16 %v301
        %v505 = vunpack.c.l.b16 %v302
        %v506 = vunpack.c.l.b16 %v303
        %v507 = vunpack.c.l.b16 %v304
        %v508 = vunpack.c.l.b16 %v305
        %v509 = vunpack.c.l.b16 %v306
        %v510 = vunpack.c.l.b16 %v307
        %v511 = vunpack.c.l.b16 %v308
        %v512 = vunpack.c.l.b16 %v309
        %v513 = vunpack.c.l.b16 %v310
        %v514 = vunpack.c.l.b16 %v311
        %v515 = vunpack.c.l.b16 %v312
        %v516 = vunpack.c.l.b16 %v313
        %v517 = vunpack.c.l.b16 %v314
        %v518 = vunpack.c.l.b16 %v315
        %v519 = vunpack.c.l.b16 %v316
        %v520 = vunpack.c.l.b16 %v317
        %v521 = vunpack.c.l.b16 %v318
        %v522 = vunpack.c.l.b16 %v319
        %v523 = vunpack.c.l.b16 %v320
        %v524 = vunpack.c.l.b16 %v321
        %v525 = vunpack.c.l.b16 %v322
        %v526 = vunpack.c.l.b16 %v323
        %v527 = vunpack.c.l.b16 %v324
        %v528 = vunpack.c.l.b16 %v325
        %v529 = vunpack.c.l.b16 %v326
        %v530 = vunpack.c.l.b16 %v327
        %v531 = vunpack.c.l.b16 %v328
        %v532 = vunpack.c.l.b16 %v329
        %v533 = vunpack.c.l.b16 %v330
        %v534 = vunpack.c.l.b16 %v331
        %v535 = vunpack.c.l.b16 %v332
        %v536 = vunpack.c.l.b16 %v333
        %v537 = vunpack.c.l.b16 %v334
        %v538 = vunpack.c.l.b16 %v335
        %v539 = vunpack.c.l.b16 %v336
        %v540 = vunpack.c.l.b16 %v337
        %v541 = vunpack.c.l.b16 %v338
        %v542 = vunpack.c.l.b16 %v339
        %v543 = vunpack.c.l.b16 %v340
        %v544 = vunpack.c.l.b16 %v341
        %v545 = vunpack.c.l.b16 %v342
        %v546 = vunpack.c.l.b16 %v343
        %v547 = vunpack.c.l.b16 %v344
        %v548 = vunpack.c.l.b16 %v345
        %v549 = vunpack.c.l.b16 %v346
        %v550 = vunpack.c.l.b16 %v347
        %v551 = vunpack.c.l.b16 %v348
        %v552 = vunpack.c.l.b16 %v349
        %v553 = vunpack.c.l.b16 %v350
        %v554 = vunpack.c.l.b16 %v351
        %v555 = vunpack.c.l.b16 %v352
        %v556 = vunpack.c.l.b16 %v353
        %v557 = vunpack.c.l.b16 %v354
        %v558 = vunpack.c.l.b16 %v355
        %v559 = vunpack.c.l.b16 %v356
        %v560 = vunpack.c.l.b16 %v357
        %v561 = vunpack.c.l.b16 %v358
        %v562 = vunpack.c.l.b16 %v359
        %v563 = vunpack.c.l.b16 %v360
        %v564 = vunpack.c.l.b16 %v361
        %v565 = vunpack.c.l.b16 %v362
        %v566 = vunpack.c.l.b16 %v363
        %v567 = vpack.c.b16 %v470, %v469
        %v568 = vpack.c.b16 %v472, %v471
        %v569 = vpack.c.b16 %v474, %v473
        %v570 = vpack.c.b16 %v476, %v475
        %v571 = vpack.c.b16 %v478, %v477
        %v572 = vpack.c.b16 %v480, %v479
        %v573 = vpack.c.b16 %v482, %v481
        %v574 = vpack.c.b16 %v484, %v483
        %v575 = vpack.c.b16 %v486, %v485
        %v576 = vpack.c.b16 %v488, %v487
        %v577 = vpack.c.b16 %v490, %v489
        %v578 = vpack.c.b16 %v492, %v491
        %v579 = vpack.c.b16 %v494, %v493
        %v580 = vpack.c.b16 %v496, %v495
        %v581 = vpack.c.b16 %v498, %v497
        %v582 = vpack.c.b16 %v500, %v499
        %v583 = vpack.c.b16 %v502, %v501
        %v584 = vpack.c.b16 %v504, %v503
        %v585 = vpack.c.b16 %v506, %v505
        %v586 = vpack.c.b16 %v508, %v507
        %v587 = vpack.c.b16 %v510, %v509
        %v588 = vpack.c.b16 %v512, %v511
        %v589 = vpack.c.b16 %v514, %v513
        %v590 = vpack.c.b16 %v516, %v515
        %v591 = vpack.c.b16 %v518, %v517
        %v592 = vpack.c.b16 %v520, %v519
        %v593 = vpack.c.b16 %v522, %v521
        %v594 = vpack.c.b16 %v524, %v523
        %v595 = vpack.c.b16 %v526, %v525
        %v596 = vpack.c.b16 %v528, %v527
        %v597 = vpack.c.b16 %v530, %v529
        %v598 = vpack.c.b16 %v532, %v531
        %v599 = vpack.c.b16 %v534, %v533
        %v600 = vpack.c.b16 %v536, %v535
        %v601 = vpack.c.b16 %v538, %v537
        %v602 = vpack.c.b16 %v540, %v539
        %v603 = vpack.c.b16 %v542, %v541
        %v604 = vpack.c.b16 %v544, %v543
        %v605 = vpack.c.b16 %v546, %v545
        %v606 = vpack.c.b16 %v548, %v547
        %v607 = vpack.c.b16 %v550, %v549
        %v608 = vpack.c.b16 %v552, %v551
        %v609 = vpack.c.b16 %v554, %v553
        %v610 = vpack.c.b16 %v556, %v555
        %v611 = vpack.c.b16 %v558, %v557
        %v612 = vpack.c.b16 %v560, %v559
        %v613 = vpack.c.b16 %v562, %v561
        %v614 = vpack.c.b16 %v564, %v563
        %v615 = vpack.c.b16 %v566, %v565
        %vm665 = vcmask 130048
        %v667 = vsel %vm665, %v265, 0
        %669 = vmatprep.subr.bf16.mxu0 0
        %670 = vmatpush1.bf16.msra.mxu0 %v574
        %671 = vmatprep.subr.bf16.mxu0 0
        %672 = vmatpush1.bf16.msra.mxu0 %v573
        %673 = vmatprep.subr.bf16.mxu0 0
        %674 = vmatpush1.bf16.msra.mxu0 %v572
        %675 = vmatprep.subr.bf16.mxu0 0
        %676 = vmatpush1.bf16.msra.mxu0 %v571
        %677 = vmatprep.subr.bf16.mxu0 0
        %678 = vmatpush1.bf16.msra.mxu0 %v570
        %679 = vmatprep.subr.bf16.mxu0 0
        %680 = vmatpush1.bf16.msra.mxu0 %v569
        %681 = vmatprep.subr.bf16.mxu0 0
        %682 = vmatpush1.bf16.msra.mxu0 %v568
        %683 = vmatprep.subr.bf16.mxu0 0
        %684 = vmatpush1.bf16.msra.mxu0 %v567
        %685 = vmatprep.subr.bf16.mxu0 0
        %686 = vmatpush2.bf16.msra.mxu0 %v582
        %687 = vmatprep.subr.bf16.mxu0 0
        %688 = vmatpush2.bf16.msra.mxu0 %v581
        %689 = vmatprep.subr.bf16.mxu0 0
        %690 = vmatpush2.bf16.msra.mxu0 %v580
        %691 = vmatprep.subr.bf16.mxu0 0
        %692 = vmatpush2.bf16.msra.mxu0 %v579
        %693 = vmatprep.subr.bf16.mxu0 0
        %694 = vmatpush2.bf16.msra.mxu0 %v578
        %695 = vmatprep.subr.bf16.mxu0 0
        %696 = vmatpush2.bf16.msra.mxu0 %v577
        %697 = vmatprep.subr.bf16.mxu0 0
        %698 = vmatpush2.bf16.msra.mxu0 %v576
        %699 = vmatprep.subr.bf16.mxu0 0
        %700 = vmatpush2.bf16.msra.mxu0 %v575
        %701 = vmatprep.mubr.bf16.mxu0 %v260
        %702 = vmatmul.mubr.bf16.gmra.mxu0 %v259
        %v703 = vpop.f32.mrf.mxu0
        %v704 = vadd.f32 %v369, %v703
        %v705 = vpop.f32.mrf.mxu0
        %v706 = vpop.f32.mrf.mxu0
        %v707 = vadd.f32 %v369, %v706
        %v708 = vpop.f32.mrf.mxu0
        %709 = vdwg.mxu0
        %710 = vmatprep.subr.bf16.mxu0 0
        %711 = vmatpush1.bf16.msra.mxu0 %v590
        %712 = vmatprep.subr.bf16.mxu0 0
        %713 = vmatpush1.bf16.msra.mxu0 %v589
        %714 = vmatprep.subr.bf16.mxu0 0
        %715 = vmatpush1.bf16.msra.mxu0 %v588
        %716 = vmatprep.subr.bf16.mxu0 0
        %717 = vmatpush1.bf16.msra.mxu0 %v587
        %718 = vmatprep.subr.bf16.mxu0 0
        %719 = vmatpush1.bf16.msra.mxu0 %v586
        %720 = vmatprep.subr.bf16.mxu0 0
        %721 = vmatpush1.bf16.msra.mxu0 %v585
        %722 = vmatprep.subr.bf16.mxu0 0
        %723 = vmatpush1.bf16.msra.mxu0 %v584
        %724 = vmatprep.subr.bf16.mxu0 0
        %725 = vmatpush1.bf16.msra.mxu0 %v583
        %726 = vmatprep.subr.bf16.mxu0 0
        %727 = vmatpush2.bf16.msra.mxu0 %v598
        %728 = vmatprep.subr.bf16.mxu0 0
        %729 = vmatpush2.bf16.msra.mxu0 %v597
        %730 = vmatprep.subr.bf16.mxu0 0
        %731 = vmatpush2.bf16.msra.mxu0 %v596
        %732 = vmatprep.subr.bf16.mxu0 0
        %733 = vmatpush2.bf16.msra.mxu0 %v595
        %734 = vmatprep.subr.bf16.mxu0 0
        %735 = vmatpush2.bf16.msra.mxu0 %v594
        %736 = vmatprep.subr.bf16.mxu0 0
        %737 = vmatpush2.bf16.msra.mxu0 %v593
        %738 = vmatprep.subr.bf16.mxu0 0
        %739 = vmatpush2.bf16.msra.mxu0 %v592
        %740 = vmatprep.subr.bf16.mxu0 0
        %741 = vmatpush2.bf16.msra.mxu0 %v591
        %742 = vmatprep.mubr.bf16.mxu0 %v262
        %743 = vmatmul.mubr.bf16.gmra.mxu0 %v261
        %v744 = vpop.f32.mrf.mxu0
        %v745 = vadd.f32 %v704, %v744
        %v746 = vpop.f32.mrf.mxu0
        %v747 = vpop.f32.mrf.mxu0
        %v748 = vadd.f32 %v707, %v747
        %v749 = vpop.f32.mrf.mxu0
        %750 = vdwg.mxu0
        %751 = vmatprep.subr.bf16.mxu0 0
        %752 = vmatpush1.bf16.msra.mxu0 %v606
        %753 = vmatprep.subr.bf16.mxu0 0
        %754 = vmatpush1.bf16.msra.mxu0 %v605
        %755 = vmatprep.subr.bf16.mxu0 0
        %756 = vmatpush1.bf16.msra.mxu0 %v604
        %757 = vmatprep.subr.bf16.mxu0 0
        %758 = vmatpush1.bf16.msra.mxu0 %v603
        %759 = vmatprep.subr.bf16.mxu0 0
        %760 = vmatpush1.bf16.msra.mxu0 %v602
        %761 = vmatprep.subr.bf16.mxu0 0
        %762 = vmatpush1.bf16.msra.mxu0 %v601
        %763 = vmatprep.subr.bf16.mxu0 0
        %764 = vmatpush1.bf16.msra.mxu0 %v600
        %765 = vmatprep.subr.bf16.mxu0 0
        %766 = vmatpush1.bf16.msra.mxu0 %v599
        %767 = vmatprep.subr.bf16.mxu0 0
        %768 = vmatpush2.bf16.msra.mxu0 %v614
        %769 = vmatprep.subr.bf16.mxu0 0
        %770 = vmatpush2.bf16.msra.mxu0 %v613
        %771 = vmatprep.subr.bf16.mxu0 0
        %772 = vmatpush2.bf16.msra.mxu0 %v612
        %773 = vmatprep.subr.bf16.mxu0 0
        %774 = vmatpush2.bf16.msra.mxu0 %v611
        %775 = vmatprep.subr.bf16.mxu0 0
        %776 = vmatpush2.bf16.msra.mxu0 %v610
        %777 = vmatprep.subr.bf16.mxu0 0
        %778 = vmatpush2.bf16.msra.mxu0 %v609
        %779 = vmatprep.subr.bf16.mxu0 0
        %780 = vmatpush2.bf16.msra.mxu0 %v608
        %781 = vmatprep.subr.bf16.mxu0 0
        %782 = vmatpush2.bf16.msra.mxu0 %v607
        %783 = vmatprep.mubr.bf16.mxu0 %v264
        %784 = vmatmul.mubr.bf16.gmra.mxu0 %v263
        %v785 = vpop.f32.mrf.mxu0
        %v786 = vadd.f32 %v745, %v785
        %v787 = vpop.f32.mrf.mxu0
        %v788 = vpop.f32.mrf.mxu0
        %v789 = vadd.f32 %v748, %v788
        %v790 = vpop.f32.mrf.mxu0
        %791 = vdwg.mxu0
        %792 = vmatprep.subr.bf16.mxu0 0
        %793 = vmatpush1.bf16.msra.mxu0 0
        %794 = vmatprep.subr.bf16.mxu0 0
        %795 = vmatpush1.bf16.msra.mxu0 0
        %796 = vmatprep.subr.bf16.mxu0 0
        %797 = vmatpush1.bf16.msra.mxu0 0
        %798 = vmatprep.subr.bf16.mxu0 0
        %799 = vmatpush1.bf16.msra.mxu0 0
        %800 = vmatprep.subr.bf16.mxu0 0
        %801 = vmatpush1.bf16.msra.mxu0 0
        %802 = vmatprep.subr.bf16.mxu0 0
        %803 = vmatpush1.bf16.msra.mxu0 0
        %804 = vmatprep.subr.bf16.mxu0 0
        %805 = vmatpush1.bf16.msra.mxu0 0
        %806 = vmatprep.subr.bf16.mxu0 0
        %807 = vmatpush1.bf16.msra.mxu0 %v615
        %808 = vmatprep.subr.bf16.mxu0 0
        %809 = vmatpush2.bf16.msra.mxu0 0
        %810 = vmatprep.subr.bf16.mxu0 0
        %811 = vmatpush2.bf16.msra.mxu0 0
        %812 = vmatprep.subr.bf16.mxu0 0
        %813 = vmatpush2.bf16.msra.mxu0 0
        %814 = vmatprep.subr.bf16.mxu0 0
        %815 = vmatpush2.bf16.msra.mxu0 0
        %816 = vmatprep.subr.bf16.mxu0 0
        %817 = vmatpush2.bf16.msra.mxu0 0
        %818 = vmatprep.subr.bf16.mxu0 0
        %819 = vmatpush2.bf16.msra.mxu0 0
        %820 = vmatprep.subr.bf16.mxu0 0
        %821 = vmatpush2.bf16.msra.mxu0 0
        %822 = vmatprep.subr.bf16.mxu0 0
        %823 = vmatpush2.bf16.msra.mxu0 0
        %824 = vmatprep.mubr.bf16.mxu0 0
        %825 = vmatmul.mubr.bf16.gmra.mxu0 %v667
        %v826 = vpop.f32.mrf.mxu0
        %v827 = vadd.f32 %v786, %v826
        %v828 = vpop.f32.mrf.mxu0
        %v829 = vpop.f32.mrf.mxu0
        %v830 = vadd.f32 %v789, %v829
        %v831 = vpop.f32.mrf.mxu0
        %832 = vdwg.mxu0
        %v833 = vpack.c.bf16 %v830, %v827
        %v834 = vld [vmem:[#allocation2] sm:$0xff]
        %v835 = vld [vmem:[#allocation2 + $0x8] sm:$0xff]
        %v836 = vld [vmem:[#allocation2 + $0x10] sm:$0xff]
        %v837 = vld [vmem:[#allocation2 + $0x18] sm:$0xf]
        %v838 = vld [vmem:[#allocation2 + $0x1c] sm:$0xff]
        %v839 = vld [vmem:[#allocation2 + $0x24] sm:$0xff]
        %v840 = vld [vmem:[#allocation2 + $0x2c] sm:$0xff]
        %v841 = vld [vmem:[#allocation2 + $0x34] sm:$0xf]
        %v842 = vld [vmem:[#allocation2 + $0x38] sm:$0xff]
        %v843 = vld [vmem:[#allocation2 + $0x40] sm:$0xff]
        %v844 = vld [vmem:[#allocation2 + $0x48] sm:$0xff]
        %v845 = vld [vmem:[#allocation2 + $0x50] sm:$0xf]
        %v846 = vld [vmem:[#allocation2 + $0x54] sm:$0xff]
        %v847 = vld [vmem:[#allocation2 + $0x5c] sm:$0xff]
        %v848 = vld [vmem:[#allocation2 + $0x64] sm:$0xff]
        %v849 = vld [vmem:[#allocation2 + $0x6c] sm:$0xf]
        %v850 = vld [vmem:[#allocation2 + $0x70] sm:$0xff]
        %v851 = vld [vmem:[#allocation2 + $0x78] sm:$0xff]
        %v852 = vld [vmem:[#allocation2 + $0x80] sm:$0xff]
        %v853 = vld [vmem:[#allocation2 + $0x88] sm:$0xf]
        %v854 = vld [vmem:[#allocation2 + $0x8c] sm:$0xff]
        %v855 = vld [vmem:[#allocation2 + $0x94] sm:$0xff]
        %v856 = vld [vmem:[#allocation2 + $0x9c] sm:$0xff]
        %v857 = vld [vmem:[#allocation2 + $0xa4] sm:$0xf]
        %v858 = vld [vmem:[#allocation2 + $0xa8] sm:$0xff]
        %v859 = vld [vmem:[#allocation2 + $0xb0] sm:$0xff]
        %v860 = vld [vmem:[#allocation2 + $0xb8] sm:$0xff]
        %v861 = vld [vmem:[#allocation2 + $0xc0] sm:$0xf]
        %v862 = vld [vmem:[#allocation2 + $0xc4] sm:$0xff]
        %v863 = vld [vmem:[#allocation2 + $0xcc] sm:$0xff]
        %v864 = vld [vmem:[#allocation2 + $0xd4] sm:$0xff]
        %v865 = vld [vmem:[#allocation2 + $0xdc] sm:$0xf]
        %v866 = vld [vmem:[%s4] sm:$0x7f]
        %v868 = vlaneseq
        %v869 = vshrl.u32 %v868, 7
        %v870 = vsub.s32 0, %v869
        %v871 = vrot.slane %v866, %v870
        %v872 = vlaneseq
        %v873 = vshrl.u32 %v872, 7
        %v874 = vsub.s32 1, %v873
        %v875 = vrot.slane %v866, %v874
        %v876 = vlaneseq
        %v877 = vshrl.u32 %v876, 7
        %v878 = vsub.s32 2, %v877
        %v879 = vrot.slane %v866, %v878
        %v880 = vlaneseq
        %v881 = vshrl.u32 %v880, 7
        %v882 = vsub.s32 3, %v881
        %v883 = vrot.slane %v866, %v882
        %v884 = vlaneseq
        %v885 = vshrl.u32 %v884, 7
        %v886 = vsub.s32 4, %v885
        %v887 = vrot.slane %v866, %v886
        %v888 = vlaneseq
        %v889 = vshrl.u32 %v888, 7
        %v890 = vsub.s32 5, %v889
        %v891 = vrot.slane %v866, %v890
        %v892 = vlaneseq
        %v893 = vshrl.u32 %v892, 7
        %v894 = vsub.s32 6, %v893
        %v895 = vrot.slane %v866, %v894
        %v935 = vunpack.c.l.b16 %v834
        %v936 = vunpack.c.h.b16 %v834
        %v937 = vunpack.c.l.b16 %v835
        %v938 = vunpack.c.h.b16 %v835
        %v939 = vunpack.c.l.b16 %v836
        %v940 = vunpack.c.h.b16 %v836
        %v941 = vunpack.c.l.b16 %v837
        %v942 = vunpack.c.l.b16 %v838
        %v943 = vunpack.c.h.b16 %v838
        %v944 = vunpack.c.l.b16 %v839
        %v945 = vunpack.c.h.b16 %v839
        %v946 = vunpack.c.l.b16 %v840
        %v947 = vunpack.c.h.b16 %v840
        %v948 = vunpack.c.l.b16 %v841
        %v949 = vunpack.c.l.b16 %v842
        %v950 = vunpack.c.h.b16 %v842
        %v951 = vunpack.c.l.b16 %v843
        %v952 = vunpack.c.h.b16 %v843
        %v953 = vunpack.c.l.b16 %v844
        %v954 = vunpack.c.h.b16 %v844
        %v955 = vunpack.c.l.b16 %v845
        %v956 = vunpack.c.l.b16 %v846
        %v957 = vunpack.c.h.b16 %v846
        %v958 = vunpack.c.l.b16 %v847
        %v959 = vunpack.c.h.b16 %v847
        %v960 = vunpack.c.l.b16 %v848
        %v961 = vunpack.c.h.b16 %v848
        %v962 = vunpack.c.l.b16 %v849
        %v963 = vunpack.c.l.b16 %v850
        %v964 = vunpack.c.h.b16 %v850
        %v965 = vunpack.c.l.b16 %v851
        %v966 = vunpack.c.h.b16 %v851
        %v967 = vunpack.c.l.b16 %v852
        %v968 = vunpack.c.h.b16 %v852
        %v969 = vunpack.c.l.b16 %v853
        %v970 = vunpack.c.l.b16 %v854
        %v971 = vunpack.c.h.b16 %v854
        %v972 = vunpack.c.l.b16 %v855
        %v973 = vunpack.c.h.b16 %v855
        %v974 = vunpack.c.l.b16 %v856
        %v975 = vunpack.c.h.b16 %v856
        %v976 = vunpack.c.l.b16 %v857
        %v977 = vunpack.c.l.b16 %v858
        %v978 = vunpack.c.h.b16 %v858
        %v979 = vunpack.c.l.b16 %v859
        %v980 = vunpack.c.h.b16 %v859
        %v981 = vunpack.c.l.b16 %v860
        %v982 = vunpack.c.h.b16 %v860
        %v983 = vunpack.c.l.b16 %v861
        %v984 = vunpack.c.l.b16 %v862
        %v985 = vunpack.c.h.b16 %v862
        %v986 = vunpack.c.l.b16 %v863
        %v987 = vunpack.c.h.b16 %v863
        %v988 = vunpack.c.l.b16 %v864
        %v989 = vunpack.c.h.b16 %v864
        %v990 = vunpack.c.l.b16 %v865
        %v991 = vpack.c.b16 %v942, %v935
        %v992 = vpack.c.b16 %v943, %v936
        %v993 = vpack.c.b16 %v944, %v937
        %v994 = vpack.c.b16 %v945, %v938
        %v995 = vpack.c.b16 %v946, %v939
        %v996 = vpack.c.b16 %v947, %v940
        %v997 = vpack.c.b16 %v948, %v941
        %v998 = vpack.c.b16 %v956, %v949
        %v999 = vpack.c.b16 %v957, %v950
        %v1000 = vpack.c.b16 %v958, %v951
        %v1001 = vpack.c.b16 %v959, %v952
        %v1002 = vpack.c.b16 %v960, %v953
        %v1003 = vpack.c.b16 %v961, %v954
        %v1004 = vpack.c.b16 %v962, %v955
        %v1005 = vpack.c.b16 %v970, %v963
        %v1006 = vpack.c.b16 %v971, %v964
        %v1007 = vpack.c.b16 %v972, %v965
        %v1008 = vpack.c.b16 %v973, %v966
        %v1009 = vpack.c.b16 %v974, %v967
        %v1010 = vpack.c.b16 %v975, %v968
        %v1011 = vpack.c.b16 %v976, %v969
        %v1012 = vpack.c.b16 %v984, %v977
        %v1013 = vpack.c.b16 %v985, %v978
        %v1014 = vpack.c.b16 %v986, %v979
        %v1015 = vpack.c.b16 %v987, %v980
        %v1016 = vpack.c.b16 %v988, %v981
        %v1017 = vpack.c.b16 %v989, %v982
        %v1018 = vpack.c.b16 %v990, %v983
        %vm1047 = vcmask 523264
        %v1049 = vsel %vm1047, %v833, 0
        %1051 = vmatprep.subr.bf16.mxu0 0
        %1052 = vmatpush1.bf16.msra.mxu0 0
        %1053 = vmatprep.subr.bf16.mxu0 0
        %1054 = vmatpush1.bf16.msra.mxu0 0
        %1055 = vmatprep.subr.bf16.mxu0 0
        %1056 = vmatpush1.bf16.msra.mxu0 0
        %1057 = vmatprep.subr.bf16.mxu0 0
        %1058 = vmatpush1.bf16.msra.mxu0 0
        %1059 = vmatprep.subr.bf16.mxu0 %v1013
        %1060 = vmatpush1.bf16.msra.mxu0 %v1012
        %1061 = vmatprep.subr.bf16.mxu0 %v1006
        %1062 = vmatpush1.bf16.msra.mxu0 %v1005
        %1063 = vmatprep.subr.bf16.mxu0 %v999
        %1064 = vmatpush1.bf16.msra.mxu0 %v998
        %1065 = vmatprep.subr.bf16.mxu0 %v992
        %1066 = vmatpush1.bf16.msra.mxu0 %v991
        %1067 = vmatprep.subr.bf16.mxu0 0
        %1068 = vmatpush2.bf16.msra.mxu0 0
        %1069 = vmatprep.subr.bf16.mxu0 0
        %1070 = vmatpush2.bf16.msra.mxu0 0
        %1071 = vmatprep.subr.bf16.mxu0 0
        %1072 = vmatpush2.bf16.msra.mxu0 0
        %1073 = vmatprep.subr.bf16.mxu0 0
        %1074 = vmatpush2.bf16.msra.mxu0 0
        %1075 = vmatprep.subr.bf16.mxu0 0
        %1076 = vmatpush2.bf16.msra.mxu0 0
        %1077 = vmatprep.subr.bf16.mxu0 0
        %1078 = vmatpush2.bf16.msra.mxu0 0
        %1079 = vmatprep.subr.bf16.mxu0 0
        %1080 = vmatpush2.bf16.msra.mxu0 0
        %1081 = vmatprep.subr.bf16.mxu0 0
        %1082 = vmatpush2.bf16.msra.mxu0 0
        %1083 = vmatprep.mubr.bf16.mxu0 0
        %1084 = vmatmul.mubr.bf16.gmra.mxu0 %v1049
        %v1085 = vpop.f32.mrf.mxu0
        %v1086 = vadd.f32 %v871, %v1085
        %v1087 = vpop.f32.mrf.mxu0
        %v1088 = vadd.f32 %v875, %v1087
        %v1089 = vpop.f32.mrf.mxu0
        %v1090 = vadd.f32 %v871, %v1089
        %v1091 = vpop.f32.mrf.mxu0
        %v1092 = vadd.f32 %v875, %v1091
        %1093 = vdwg.mxu0
        %1094 = vmatprep.subr.bf16.mxu0 0
        %1095 = vmatpush1.bf16.msra.mxu0 0
        %1096 = vmatprep.subr.bf16.mxu0 0
        %1097 = vmatpush1.bf16.msra.mxu0 0
        %1098 = vmatprep.subr.bf16.mxu0 0
        %1099 = vmatpush1.bf16.msra.mxu0 0
        %1100 = vmatprep.subr.bf16.mxu0 0
        %1101 = vmatpush1.bf16.msra.mxu0 0
        %1102 = vmatprep.subr.bf16.mxu0 %v1015
        %1103 = vmatpush1.bf16.msra.mxu0 %v1014
        %1104 = vmatprep.subr.bf16.mxu0 %v1008
        %1105 = vmatpush1.bf16.msra.mxu0 %v1007
        %1106 = vmatprep.subr.bf16.mxu0 %v1001
        %1107 = vmatpush1.bf16.msra.mxu0 %v1000
        %1108 = vmatprep.subr.bf16.mxu0 %v994
        %1109 = vmatpush1.bf16.msra.mxu0 %v993
        %1110 = vmatprep.subr.bf16.mxu0 0
        %1111 = vmatpush2.bf16.msra.mxu0 0
        %1112 = vmatprep.subr.bf16.mxu0 0
        %1113 = vmatpush2.bf16.msra.mxu0 0
        %1114 = vmatprep.subr.bf16.mxu0 0
        %1115 = vmatpush2.bf16.msra.mxu0 0
        %1116 = vmatprep.subr.bf16.mxu0 0
        %1117 = vmatpush2.bf16.msra.mxu0 0
        %1118 = vmatprep.subr.bf16.mxu0 0
        %1119 = vmatpush2.bf16.msra.mxu0 0
        %1120 = vmatprep.subr.bf16.mxu0 0
        %1121 = vmatpush2.bf16.msra.mxu0 0
        %1122 = vmatprep.subr.bf16.mxu0 0
        %1123 = vmatpush2.bf16.msra.mxu0 0
        %1124 = vmatprep.subr.bf16.mxu0 0
        %1125 = vmatpush2.bf16.msra.mxu0 0
        %1126 = vmatprep.mubr.bf16.mxu0 0
        %1127 = vmatmul.mubr.bf16.gmra.mxu0 %v1049
        %v1128 = vpop.f32.mrf.mxu0
        %v1129 = vadd.f32 %v879, %v1128
        %v1130 = vpop.f32.mrf.mxu0
        %v1131 = vadd.f32 %v883, %v1130
        %v1132 = vpop.f32.mrf.mxu0
        %v1133 = vadd.f32 %v879, %v1132
        %v1134 = vpop.f32.mrf.mxu0
        %v1135 = vadd.f32 %v883, %v1134
        %1136 = vdwg.mxu0
        %1137 = vmatprep.subr.bf16.mxu0 0
        %1138 = vmatpush1.bf16.msra.mxu0 0
        %1139 = vmatprep.subr.bf16.mxu0 0
        %1140 = vmatpush1.bf16.msra.mxu0 0
        %1141 = vmatprep.subr.bf16.mxu0 0
        %1142 = vmatpush1.bf16.msra.mxu0 0
        %1143 = vmatprep.subr.bf16.mxu0 0
        %1144 = vmatpush1.bf16.msra.mxu0 0
        %1145 = vmatprep.subr.bf16.mxu0 %v1017
        %1146 = vmatpush1.bf16.msra.mxu0 %v1016
        %1147 = vmatprep.subr.bf16.mxu0 %v1010
        %1148 = vmatpush1.bf16.msra.mxu0 %v1009
        %1149 = vmatprep.subr.bf16.mxu0 %v1003
        %1150 = vmatpush1.bf16.msra.mxu0 %v1002
        %1151 = vmatprep.subr.bf16.mxu0 %v996
        %1152 = vmatpush1.bf16.msra.mxu0 %v995
        %1153 = vmatprep.subr.bf16.mxu0 0
        %1154 = vmatpush2.bf16.msra.mxu0 0
        %1155 = vmatprep.subr.bf16.mxu0 0
        %1156 = vmatpush2.bf16.msra.mxu0 0
        %1157 = vmatprep.subr.bf16.mxu0 0
        %1158 = vmatpush2.bf16.msra.mxu0 0
        %1159 = vmatprep.subr.bf16.mxu0 0
        %1160 = vmatpush2.bf16.msra.mxu0 0
        %1161 = vmatprep.subr.bf16.mxu0 0
        %1162 = vmatpush2.bf16.msra.mxu0 0
        %1163 = vmatprep.subr.bf16.mxu0 0
        %1164 = vmatpush2.bf16.msra.mxu0 0
        %1165 = vmatprep.subr.bf16.mxu0 0
        %1166 = vmatpush2.bf16.msra.mxu0 0
        %1167 = vmatprep.subr.bf16.mxu0 0
        %1168 = vmatpush2.bf16.msra.mxu0 0
        %1169 = vmatprep.mubr.bf16.mxu0 0
        %1170 = vmatmul.mubr.bf16.gmra.mxu0 %v1049
        %v1171 = vpop.f32.mrf.mxu0
        %v1172 = vadd.f32 %v887, %v1171
        %v1173 = vpop.f32.mrf.mxu0
        %v1174 = vadd.f32 %v891, %v1173
        %v1175 = vpop.f32.mrf.mxu0
        %v1176 = vadd.f32 %v887, %v1175
        %v1177 = vpop.f32.mrf.mxu0
        %v1178 = vadd.f32 %v891, %v1177
        %1179 = vdwg.mxu0
        %1180 = vmatprep.subr.bf16.mxu0 0
        %1181 = vmatpush1.bf16.msra.mxu0 0
        %1182 = vmatprep.subr.bf16.mxu0 0
        %1183 = vmatpush1.bf16.msra.mxu0 0
        %1184 = vmatprep.subr.bf16.mxu0 0
        %1185 = vmatpush1.bf16.msra.mxu0 0
        %1186 = vmatprep.subr.bf16.mxu0 0
        %1187 = vmatpush1.bf16.msra.mxu0 0
        %1188 = vmatprep.subr.bf16.mxu0 0
        %1189 = vmatpush1.bf16.msra.mxu0 %v1018
        %1190 = vmatprep.subr.bf16.mxu0 0
        %1191 = vmatpush1.bf16.msra.mxu0 %v1011
        %1192 = vmatprep.subr.bf16.mxu0 0
        %1193 = vmatpush1.bf16.msra.mxu0 %v1004
        %1194 = vmatprep.subr.bf16.mxu0 0
        %1195 = vmatpush1.bf16.msra.mxu0 %v997
        %1196 = vmatprep.subr.bf16.mxu0 0
        %1197 = vmatpush2.bf16.msra.mxu0 0
        %1198 = vmatprep.subr.bf16.mxu0 0
        %1199 = vmatpush2.bf16.msra.mxu0 0
        %1200 = vmatprep.subr.bf16.mxu0 0
        %1201 = vmatpush2.bf16.msra.mxu0 0
        %1202 = vmatprep.subr.bf16.mxu0 0
        %1203 = vmatpush2.bf16.msra.mxu0 0
        %1204 = vmatprep.subr.bf16.mxu0 0
        %1205 = vmatpush2.bf16.msra.mxu0 0
        %1206 = vmatprep.subr.bf16.mxu0 0
        %1207 = vmatpush2.bf16.msra.mxu0 0
        %1208 = vmatprep.subr.bf16.mxu0 0
        %1209 = vmatpush2.bf16.msra.mxu0 0
        %1210 = vmatprep.subr.bf16.mxu0 0
        %1211 = vmatpush2.bf16.msra.mxu0 0
        %1212 = vmatprep.mubr.bf16.mxu0 0
        %1213 = vmatmul.mubr.bf16.gmra.mxu0 %v1049
        %v1214 = vpop.f32.mrf.mxu0
        %v1215 = vadd.f32 %v895, %v1214
        %v1216 = vpop.f32.mrf.mxu0
        %v1217 = vpop.f32.mrf.mxu0
        %v1218 = vadd.f32 %v895, %v1217
        %v1219 = vpop.f32.mrf.mxu0
        %1220 = vdwg.mxu0
        %1221 = vst [vmem:[%s235] sm:$0xff] %v1086
        %1222 = vst [vmem:[%s235 + $0x8] sm:$0xff] %v1088
        %1223 = vst [vmem:[%s235 + $0x10] sm:$0xff] %v1129
        %1224 = vst [vmem:[%s235 + $0x18] sm:$0xff] %v1131
        %1225 = vst [vmem:[%s235 + $0x20] sm:$0xff] %v1172
        %1226 = vst [vmem:[%s235 + $0x28] sm:$0xff] %v1174
        %1227 = vst.msk [vmem:[%s235 + $0x30] sm:$0xff] %vm665, %v1215
        %1228 = vst [vmem:[%s235 + $0x38] sm:$0xff] %v1090
        %1229 = vst [vmem:[%s235 + $0x40] sm:$0xff] %v1092
        %1230 = vst [vmem:[%s235 + $0x48] sm:$0xff] %v1133
        %1231 = vst [vmem:[%s235 + $0x50] sm:$0xff] %v1135
        %1232 = vst [vmem:[%s235 + $0x58] sm:$0xff] %v1176
        %1233 = vst [vmem:[%s235 + $0x60] sm:$0xff] %v1178
        %1234 = vst.msk [vmem:[%s235 + $0x68] sm:$0xff] %vm665, %v1218
        %s1235 = sand.u32 %s138, 1
        %s1236 = scalar_lea.sflag [#allocation4], %s1235
        %s1237 = sand.u32 %s138, 1
        %s1238 = smul.addr %s1237, 112
        %s1239 = scalar_lea.vmem [#allocation5], %s1238
        // Predicated region
        $region45: #{tpu_custom_call.1} parent=39 // pred_check
          %p1240 = pneg %p148
        $region46: #{tpu_custom_call.1} parent=39 // pred_check_branch
          %1242 = sbr.rel (%p1240) target = $region48
        $region47: #{tpu_custom_call.1} parent=39 // pred_region
          %s1243 = smul.u32 2, %s20
          %s1245 = ssub.s32 1792, 1792
          %1246 = vsyncadd %s1236, %s1245
          %s1247 = smul.addr %s1243, 7
          %s1248 = smul.addr %s1247, 128
          %s1249 = scalar_lea.hbm %s5, %s1248
          %s1250 = sshll.u32 %s1239, 4
          %s1251 = int_to_ptr.vmem [resolvable:$true] %s1250
          %1256 = dma.vmem_to_hbm [thread:$0]  %s1251, 1792, %s1249, %s1236, 896, 896, 56
        $region48: #{tpu_custom_call.1} parent=39 // pred_fallthru
          _
      $region40: #{tpu_custom_call.1} parent=5 // pred_fallthru
        _
      %p1257 = scmp.le.s32.totalorder 2, %s15
      // Predicated region
      $region49: #{tpu_custom_call.1} parent=5 // pred_check
        %p1258 = pneg %p1257
      $region50: #{tpu_custom_call.1} parent=5 // pred_check_branch
        %1260 = sbr.rel (%p1258) target = $region52
      $region51: #{tpu_custom_call.1} parent=5 // pred_region
        %s1261 = ssub.s32 %s15, 2
        // Predicated region
        $region53: #{tpu_custom_call.1} parent=51 // pred_check
          %p1262 = pneg %p154
        $region54: #{tpu_custom_call.1} parent=51 // pred_check_branch
          %1264 = sbr.rel (%p1262) target = $region56
        $region55: #{tpu_custom_call.1} parent=51 // pred_region
          %s1265 = sand.u32 %s139, 1
          %s1266 = scalar_lea.sflag [#allocation4], %s1265
          %s1267 = sand.u32 %s139, 1
          %s1268 = smul.addr %s1267, 112
          %s1269 = scalar_lea.vmem [#allocation5], %s1268
          %1270 = dma.done %s1266, 1792
        $region56: #{tpu_custom_call.1} parent=51 // pred_fallthru
          _
      $region52: #{tpu_custom_call.1} parent=5 // pred_fallthru
        _
    $region6: #{tpu_custom_call.1} parent=1 // loop_footer
      %s19 = sadd.s32 1, %s15
    $region7: #{tpu_custom_call.1} parent=1 // loop_footer_branch
      %14 = sbr.rel target = $region3
    $region8: #{tpu_custom_call.1} parent=1 // loop_exit
      _
    %1271 = vsyncpa [#allocation3], 1
    %s1272 = scalar_lea.sflag [#allocation3], 1
    %1273 = vsyncpa %s1272, 1
    %1274 = vsyncpa [#allocation4], 1
    %s1275 = scalar_lea.sflag [#allocation4], 1
    %1276 = vsyncpa %s1275, 1

</llo_original>
